<compile_context>
chip_gen: v7x
topology: tpu7x:2x2x1
jax: 0.10.0
libtpu: 0.0.40
codegen_flags: <defaults>
</compile_context>

<pallas_src>
import functools
import math

import jax
import jax.numpy as jnp
from jax.experimental import pallas as pl
from jax.experimental.pallas import tpu as pltpu

LANE = 128
SUBLANE = 8


def _cdiv(a, b):
    return (a + b - 1) // b


def _round_up(x, m):
    return _cdiv(x, m) * m


def _bezier_kernel(t_ref, ctrl_ref, out_ref):
    # t_ref    : [TILE_R, 128]     VMEM  (lane-dense sample parameters)
    # ctrl_ref : [K*D]             SMEM  (binom-folded control points, [k, d] row-major)
    # out_ref  : [D, TILE_R, 128]  VMEM  (lane-dense output, one plane per dim)
    D = out_ref.shape[0]
    K = ctrl_ref.shape[0] // D
    C = K - 1

    t = t_ref[...]            # [TILE_R, 128] f32
    u = 1.0 - t

    # Integer powers t^1..t^C, u^1..u^C by repeated multiply (exact at t=0,1;
    # no exp/log path). All intermediates are full (8,128)-tiled f32 vregs.
    t_pows = [t]
    u_pows = [u]
    for _ in range(C - 1):
        t_pows.append(t_pows[-1] * t)
        u_pows.append(u_pows[-1] * u)

    def _pw(pows, j):
        return pows[j - 1] if j >= 1 else None   # None == implicit 1

    # Bernstein basis (binomial factor already folded into ctrl on the host):
    #   coeff_k = t^(C-k) * (1-t)^k
    coeffs = []
    for k in range(K):
        a = _pw(t_pows, C - k)
        b = _pw(u_pows, k)
        if a is None and b is None:
            c = jnp.ones_like(t)
        elif a is None:
            c = b
        elif b is None:
            c = a
        else:
            c = a * b
        coeffs.append(c)

    # VPU FMA accumulation, one output plane per spatial dimension.
    # Direct per-plane stores: no concat, each accumulator retires immediately.
    for d in range(D):
        acc = coeffs[0] * ctrl_ref[d]
        for k in range(1, K):
            acc = acc + coeffs[k] * ctrl_ref[k * D + d]
        out_ref[d] = acc.astype(out_ref.dtype)


def _bezier_forward_impl(t, control_points, binom, idx, *, max_samples_per_step):
    """Pallas equivalent of BezierModel.forward(t, idx) -> [F, D]."""
    F = t.shape[0]
    N, K, D = control_points.shape

    # Repack F into rows of 128 lanes; rows padded to a multiple of 8 sublanes.
    rows_total = _round_up(_cdiv(max(F, 1), LANE), SUBLANE)
    max_rows = max(SUBLANE, (max_samples_per_step // LANE) // SUBLANE * SUBLANE)
    tile_r = min(max_rows, rows_total)
    rows_pad = _round_up(rows_total, tile_r)
    f_pad = rows_pad * LANE
    grid = (rows_pad // tile_r,)

    t_pad = jnp.pad(t.astype(jnp.float32), (0, f_pad - F)).reshape(rows_pad, LANE)

    # Select the requested curve and fold the binomial coefficients into it.
    # The resulting K*D (= 12 for cubic/3D) scalars live in SMEM.
    ctrl_scaled = (
        control_points[idx].astype(jnp.float32)
        * binom.astype(jnp.float32)[:, None]
    ).reshape(K * D)

    out = pl.pallas_call(
        _bezier_kernel,
        out_shape=jax.ShapeDtypeStruct((D, rows_pad, LANE), jnp.float32),
        grid_spec=pl.GridSpec(
            grid=grid,
            in_specs=[
                pl.BlockSpec((tile_r, LANE), lambda i: (i, 0)),
                pl.BlockSpec(memory_space=pltpu.MemorySpace.SMEM),
            ],
            out_specs=pl.BlockSpec((D, tile_r, LANE), lambda i: (0, i, 0)),
        ),
        compiler_params=pltpu.CompilerParams(
            dimension_semantics=("parallel",),
        ),
    )(t_pad, ctrl_scaled)

    # Lane-dense [D, rows_pad, 128] -> [D, F_pad] -> module's [F, D].
    # Slice + transpose stay inside the jitted wrapper so XLA fuses them.
    return out.reshape(D, f_pad)[:, :F].T


bezier_forward = jax.jit(
    _bezier_forward_impl, static_argnames=("max_samples_per_step",)
)


def bezier_reference(t, control_points, binom, idx):
    """Plain-JAX port of the PyTorch forward, for verification."""
    C = control_points.shape[1] - 1
    exps_desc = jnp.arange(C, -1, -1, dtype=jnp.float32)
    exps_asc = jnp.arange(0, C + 1, dtype=jnp.float32)
    t = t.astype(jnp.float32)
    coeff = (t[:, None] ** exps_desc) * ((1.0 - t)[:, None] ** exps_asc) * binom
    ctrl = control_points[jnp.asarray([idx])]          # [1, K, D]
    return (coeff[:, :, None] * ctrl).sum(axis=1)      # [F, D]


if __name__ == "__main__":
    # Module hyper-parameters (deterministic synthetic init — no checkpoint load).
    num_curves = 5
    dim = 3
    curve_order = 3
    K = curve_order + 1
    initial_noise = 0.001
    num_samples = 8
    idx = 2

    key = jax.random.PRNGKey(0)
    k_pts, k_noise, k_t, k_t2, k_t3 = jax.random.split(key, 5)

    # __init__: initial_points [N, D] -> repeat along new axis -> + noise
    initial_points = jax.random.normal(k_pts, (num_curves, dim), dtype=jnp.float32)
    control_points = jnp.repeat(initial_points[:, None, :], K, axis=1)
    control_points = control_points + (
        jax.random.normal(k_noise, control_points.shape, dtype=jnp.float32)
        * initial_noise
    )

    binom = jnp.asarray(
        [math.comb(curve_order, k) for k in range(K)], dtype=jnp.float32
    )

    idx_arr = jnp.int32(idx)

    # Small forward pass (single (8,128) tile).
    t = jax.random.uniform(k_t, (num_samples,), dtype=jnp.float32)
    out = jax.block_until_ready(
        bezier_forward(t, control_points, binom, idx_arr, max_samples_per_step=8192)
    )
    ref = jax.block_until_ready(bezier_reference(t, control_points, binom, idx))
    assert out.shape == (num_samples, dim)
    assert jnp.allclose(out, ref, atol=1e-5, rtol=1e-5), (out, ref)

    # Medium forward pass (1000 samples, still a single grid step).
    t_big = jax.random.uniform(k_t2, (1000,), dtype=jnp.float32)
    out_big = jax.block_until_ready(
        bezier_forward(t_big, control_points, binom, idx_arr, max_samples_per_step=8192)
    )
    ref_big = jax.block_until_ready(bezier_reference(t_big, control_points, binom, idx))
    assert out_big.shape == (1000, dim)
    assert jnp.allclose(out_big, ref_big, atol=1e-5, rtol=1e-5)

    # Multi-tile grid (padded, pipelined, "parallel" F axis): force small tiles.
    t_multi = jax.random.uniform(k_t3, (3000,), dtype=jnp.float32)
    out_multi = jax.block_until_ready(
        bezier_forward(t_multi, control_points, binom, idx_arr,
                       max_samples_per_step=1024)
    )
    ref_multi = jax.block_until_ready(
        bezier_reference(t_multi, control_points, binom, idx)
    )
    assert out_multi.shape == (3000, dim)
    assert jnp.allclose(out_multi, ref_multi, atol=1e-5, rtol=1e-5)

    print("KERNEL_OK")
</pallas_src>

<mosaic_0001>
module attributes {stable_mosaic.version = 11 : i64} {
  func.func @_bezier_kernel(%arg0: i32, %arg1: memref<8x128xf32, #tpu.memory_space<vmem>>, %arg2: memref<12xf32, #tpu.memory_space<smem>>, %arg3: memref<3x8x128xf32, #tpu.memory_space<vmem>>) attributes {dimension_semantics = [#tpu.dimension_semantics<parallel>], iteration_bounds = array<i64: 1>, scalar_prefetch = 0 : i64, scratch_operands = 0 : i64, tpu.core_type = #tpu.core_type<tc>, window_params = [{transform_indices = @transform_0, window_bounds = array<i64: 8, 128>}, {transform_indices = @transform_1, window_bounds = array<i64: 12>}, {transform_indices = @transform_2, window_bounds = array<i64: 3, 8, 128>}]} {
    %c0 = arith.constant 0 : index
    %c0_0 = arith.constant 0 : index
    %0 = vector.load %arg1[%c0, %c0_0] : memref<8x128xf32, #tpu.memory_space<vmem>>, vector<8x128xf32>
    %cst = arith.constant 1.000000e+00 : f32
    %1 = vector.broadcast %cst : f32 to vector<8x128xf32>
    %2 = arith.subf %1, %0 : vector<8x128xf32>
    %3 = arith.mulf %0, %0 : vector<8x128xf32>
    %4 = arith.mulf %2, %2 : vector<8x128xf32>
    %5 = arith.mulf %3, %0 : vector<8x128xf32>
    %6 = arith.mulf %4, %2 : vector<8x128xf32>
    %7 = arith.mulf %3, %2 : vector<8x128xf32>
    %8 = arith.mulf %0, %4 : vector<8x128xf32>
    %c0_1 = arith.constant 0 : index
    %9 = memref.load %arg2[%c0_1] : memref<12xf32, #tpu.memory_space<smem>>
    %10 = vector.broadcast %9 : f32 to vector<8x128xf32>
    %11 = arith.mulf %5, %10 : vector<8x128xf32>
    %c3 = arith.constant 3 : index
    %12 = memref.load %arg2[%c3] : memref<12xf32, #tpu.memory_space<smem>>
    %13 = vector.broadcast %12 : f32 to vector<8x128xf32>
    %14 = arith.mulf %7, %13 : vector<8x128xf32>
    %15 = arith.addf %11, %14 : vector<8x128xf32>
    %c6 = arith.constant 6 : index
    %16 = memref.load %arg2[%c6] : memref<12xf32, #tpu.memory_space<smem>>
    %17 = vector.broadcast %16 : f32 to vector<8x128xf32>
    %18 = arith.mulf %8, %17 : vector<8x128xf32>
    %19 = arith.addf %15, %18 : vector<8x128xf32>
    %c9 = arith.constant 9 : index
    %20 = memref.load %arg2[%c9] : memref<12xf32, #tpu.memory_space<smem>>
    %21 = vector.broadcast %20 : f32 to vector<8x128xf32>
    %22 = arith.mulf %6, %21 : vector<8x128xf32>
    %23 = arith.addf %19, %22 : vector<8x128xf32>
    %c0_2 = arith.constant 0 : index
    %c0_3 = arith.constant 0 : index
    %c0_4 = arith.constant 0 : index
    %24 = vector.load %arg3[%c0_2, %c0_3, %c0_4] : memref<3x8x128xf32, #tpu.memory_space<vmem>>, vector<1x8x128xf32>
    %25 = vector.shape_cast %24 : vector<1x8x128xf32> to vector<8x128xf32>
    %26 = vector.shape_cast %23 : vector<8x128xf32> to vector<1x8x128xf32>
    tpu.vector_store %arg3[%c0_2, %c0_3, %c0_4], %26 {strides = array<i32>} : memref<3x8x128xf32, #tpu.memory_space<vmem>>, vector<1x8x128xf32>,
    %c1 = arith.constant 1 : index
    %27 = memref.load %arg2[%c1] : memref<12xf32, #tpu.memory_space<smem>>
    %28 = vector.broadcast %27 : f32 to vector<8x128xf32>
    %29 = arith.mulf %5, %28 : vector<8x128xf32>
    %c4 = arith.constant 4 : index
    %30 = memref.load %arg2[%c4] : memref<12xf32, #tpu.memory_space<smem>>
    %31 = vector.broadcast %30 : f32 to vector<8x128xf32>
    %32 = arith.mulf %7, %31 : vector<8x128xf32>
    %33 = arith.addf %29, %32 : vector<8x128xf32>
    %c7 = arith.constant 7 : index
    %34 = memref.load %arg2[%c7] : memref<12xf32, #tpu.memory_space<smem>>
    %35 = vector.broadcast %34 : f32 to vector<8x128xf32>
    %36 = arith.mulf %8, %35 : vector<8x128xf32>
    %37 = arith.addf %33, %36 : vector<8x128xf32>
    %c10 = arith.constant 10 : index
    %38 = memref.load %arg2[%c10] : memref<12xf32, #tpu.memory_space<smem>>
    %39 = vector.broadcast %38 : f32 to vector<8x128xf32>
    %40 = arith.mulf %6, %39 : vector<8x128xf32>
    %41 = arith.addf %37, %40 : vector<8x128xf32>
    %c1_5 = arith.constant 1 : index
    %c0_6 = arith.constant 0 : index
    %c0_7 = arith.constant 0 : index
    %42 = vector.load %arg3[%c1_5, %c0_6, %c0_7] : memref<3x8x128xf32, #tpu.memory_space<vmem>>, vector<1x8x128xf32>
    %43 = vector.shape_cast %42 : vector<1x8x128xf32> to vector<8x128xf32>
    %44 = vector.shape_cast %41 : vector<8x128xf32> to vector<1x8x128xf32>
    tpu.vector_store %arg3[%c1_5, %c0_6, %c0_7], %44 {strides = array<i32>} : memref<3x8x128xf32, #tpu.memory_space<vmem>>, vector<1x8x128xf32>,
    %c2 = arith.constant 2 : index
    %45 = memref.load %arg2[%c2] : memref<12xf32, #tpu.memory_space<smem>>
    %46 = vector.broadcast %45 : f32 to vector<8x128xf32>
    %47 = arith.mulf %5, %46 : vector<8x128xf32>
    %c5 = arith.constant 5 : index
    %48 = memref.load %arg2[%c5] : memref<12xf32, #tpu.memory_space<smem>>
    %49 = vector.broadcast %48 : f32 to vector<8x128xf32>
    %50 = arith.mulf %7, %49 : vector<8x128xf32>
    %51 = arith.addf %47, %50 : vector<8x128xf32>
    %c8 = arith.constant 8 : index
    %52 = memref.load %arg2[%c8] : memref<12xf32, #tpu.memory_space<smem>>
    %53 = vector.broadcast %52 : f32 to vector<8x128xf32>
    %54 = arith.mulf %8, %53 : vector<8x128xf32>
    %55 = arith.addf %51, %54 : vector<8x128xf32>
    %c11 = arith.constant 11 : index
    %56 = memref.load %arg2[%c11] : memref<12xf32, #tpu.memory_space<smem>>
    %57 = vector.broadcast %56 : f32 to vector<8x128xf32>
    %58 = arith.mulf %6, %57 : vector<8x128xf32>
    %59 = arith.addf %55, %58 : vector<8x128xf32>
    %c2_8 = arith.constant 2 : index
    %c0_9 = arith.constant 0 : index
    %c0_10 = arith.constant 0 : index
    %60 = vector.load %arg3[%c2_8, %c0_9, %c0_10] : memref<3x8x128xf32, #tpu.memory_space<vmem>>, vector<1x8x128xf32>
    %61 = vector.shape_cast %60 : vector<1x8x128xf32> to vector<8x128xf32>
    %62 = vector.shape_cast %59 : vector<8x128xf32> to vector<1x8x128xf32>
    tpu.vector_store %arg3[%c2_8, %c0_9, %c0_10], %62 {strides = array<i32>} : memref<3x8x128xf32, #tpu.memory_space<vmem>>, vector<1x8x128xf32>,
    return
  }
  func.func @transform_0(%arg0: i32) -> (i32, i32) {
    %c0_i32 = arith.constant 0 : i32
    %c0_i32_0 = arith.constant 0 : i32
    return %arg0, %c0_i32 : i32, i32
  }
  func.func @transform_1(%arg0: i32) -> i32 {
    %c0_i32 = arith.constant 0 : i32
    %c0_i32_0 = arith.constant 0 : i32
    return %c0_i32 : i32
  }
  func.func @transform_2(%arg0: i32) -> (i32, i32, i32) {
    %c0_i32 = arith.constant 0 : i32
    %c0_i32_0 = arith.constant 0 : i32
    %c0_i32_1 = arith.constant 0 : i32
    return %c0_i32, %arg0, %c0_i32_0 : i32, i32, i32
  }
}

</mosaic_0001>

<llo_original>
// kernel: mul.0
$region0: #{mul.0}
  #allocation0 [shape = 's32[1]{0}', space=sflag, size = 0x4, scoped, tag = 'scoped memory for mul.0']
  %s0 = inlined_call_operand.vmem [shape: f32[12], index: 0, kind: input, shape index: {}]
  %s1 = inlined_call_operand.vmem [shape: f32[12], index: 1, kind: input, shape index: {}]
  %s2 = inlined_call_operand.vmem [shape: f32[12], index: 2, kind: output, shape index: {}]
  %v3 = vld [vmem:[%s0] sm:$0x1]
  %v4 = vld [vmem:[%s1] sm:$0x1]
  %5 = xla_tuple %v3, %v4
  %6 = xla_tuple %5
  %v7 = vmul.f32 %v3, %v4
  %8 = xla_tuple %v7
  %9 = vst [vmem:[%s2] sm:$0x1] %v7

// kernel: _bezier_forward_impl.1
$region0: #{_bezier_forward_impl.1}
  #allocation0 [shape = 'u32[]', space=smem, size = 0x4, offset = 0x4, fixed_abs, tag = 'smem constant byte address 0x4 - core index']
  #allocation1 [shape = 'u32[144,128]{1,0:T(1,128)}', space=vmem, size = 0x12000, scoped, tag = 'internal scratch']
  %s0 = inlined_call_operand.vmem [shape: f32[8,128], index: 0, kind: input, shape index: {}]
  %s1 = inlined_call_operand.vmem [shape: f32[12], index: 1, kind: input, shape index: {}]
  %s2 = inlined_call_operand.vmem [shape: f32[3,8,128], index: 2, kind: output, shape index: {}]
  %s3 = sld [smem:[#allocation0]]
  $region22: #{_bezier_forward_impl.1} parent=0
    _
  %s5 = ssub.s32 1, %s3
  %s6 = scalar_select 0, %s5, %s3
  $region1: #{_bezier_forward_impl.1} parent=0
    #allocation2 [shape = 'u8[512]{0}', space=smem, size = 0x200, scoped, tag = 'input window, operand 1, single buffered']
    #allocation3 [shape = 's32[1]{0}', space=sflag, size = 0x4, scoped, tag = 'scoped memory for _bezier_forward_impl.1']
    %7 = vsyncpa [#allocation3], 0
    // Predicated region
    $region2: #{_bezier_forward_impl.1} parent=1 // pred_check
      _
    $region3: #{_bezier_forward_impl.1} parent=1 // pred_check_branch
      %9 = sbr.rel (0) target = $region5
    $region4: #{_bezier_forward_impl.1} parent=1 // pred_region
      _
    $region5: #{_bezier_forward_impl.1} parent=1 // pred_fallthru
      _
    // Predicated region
    $region6: #{_bezier_forward_impl.1} parent=1 // pred_check
      _
    $region7: #{_bezier_forward_impl.1} parent=1 // pred_check_branch
      %11 = sbr.rel (0) target = $region9
    $region8: #{_bezier_forward_impl.1} parent=1 // pred_region
      %s13 = ssub.s32 16, 16
      %14 = vsyncadd [#allocation3], %s13
      %s16 = sshll.u32 %s1, 4
      %s17 = int_to_ptr.vmem [resolvable:$true] %s16
      %19 = dma.vmem_to_smem %s17, 16, [#allocation2], [#allocation3]
    $region9: #{_bezier_forward_impl.1} parent=1 // pred_fallthru
      _
    // Predicated region
    $region10: #{_bezier_forward_impl.1} parent=1 // pred_check
      _
    $region11: #{_bezier_forward_impl.1} parent=1 // pred_check_branch
      %21 = sbr.rel (0) target = $region13
    $region12: #{_bezier_forward_impl.1} parent=1 // pred_region
      %22 = dma.done [#allocation3], 16
    $region13: #{_bezier_forward_impl.1} parent=1 // pred_fallthru
      _
    %23 = sfence
    %v24 = vld [vmem:[%s0] sm:$0xff]
    %v25 = vsub.f32 1.0, %v24
    %v26 = vmul.f32 %v24, %v24
    %v27 = vmul.f32 %v25, %v25
    %v28 = vmul.f32 %v26, %v24
    %v29 = vmul.f32 %v27, %v25
    %v30 = vmul.f32 %v26, %v25
    %v31 = vmul.f32 %v24, %v27
    %s32 = sld [smem:[#allocation2]]
    %v33 = vstv %s32
    %v34 = vmul.f32 %v28, %v33
    %s35 = sld [smem:[#allocation2 + $0x3]]
    %v36 = vstv %s35
    %v37 = vmul.f32 %v30, %v36
    %v38 = vadd.f32 %v34, %v37
    %s39 = sld [smem:[#allocation2 + $0x6]]
    %v40 = vstv %s39
    %v41 = vmul.f32 %v31, %v40
    %v42 = vadd.f32 %v38, %v41
    %s43 = sld [smem:[#allocation2 + $0x9]]
    %v44 = vstv %s43
    %v45 = vmul.f32 %v29, %v44
    %v46 = vadd.f32 %v42, %v45
    %47 = vst [vmem:[%s2] sm:$0xff] %v46
    %s48 = sld [smem:[#allocation2 + $0x1]]
    %v49 = vstv %s48
    %v50 = vmul.f32 %v28, %v49
    %s51 = sld [smem:[#allocation2 + $0x4]]
    %v52 = vstv %s51
    %v53 = vmul.f32 %v30, %v52
    %v54 = vadd.f32 %v50, %v53
    %s55 = sld [smem:[#allocation2 + $0x7]]
    %v56 = vstv %s55
    %v57 = vmul.f32 %v31, %v56
    %v58 = vadd.f32 %v54, %v57
    %s59 = sld [smem:[#allocation2 + $0xa]]
    %v60 = vstv %s59
    %v61 = vmul.f32 %v29, %v60
    %v62 = vadd.f32 %v58, %v61
    %s63 = scalar_lea.vmem %s2, 8
    %64 = vst [vmem:[%s63] sm:$0xff] %v62
    %s65 = sld [smem:[#allocation2 + $0x2]]
    %v66 = vstv %s65
    %v67 = vmul.f32 %v28, %v66
    %s68 = sld [smem:[#allocation2 + $0x5]]
    %v69 = vstv %s68
    %v70 = vmul.f32 %v30, %v69
    %v71 = vadd.f32 %v67, %v70
    %s72 = sld [smem:[#allocation2 + $0x8]]
    %v73 = vstv %s72
    %v74 = vmul.f32 %v31, %v73
    %v75 = vadd.f32 %v71, %v74
    %s76 = sld [smem:[#allocation2 + $0xb]]
    %v77 = vstv %s76
    %v78 = vmul.f32 %v29, %v77
    %v79 = vadd.f32 %v75, %v78
    %s80 = scalar_lea.vmem %s2, 16
    %81 = vst [vmem:[%s80] sm:$0xff] %v79
    // Predicated region
    $region14: #{_bezier_forward_impl.1} parent=1 // pred_check
      _
    $region15: #{_bezier_forward_impl.1} parent=1 // pred_check_branch
      %83 = sbr.rel (0) target = $region17
    $region16: #{_bezier_forward_impl.1} parent=1 // pred_region
      _
    $region17: #{_bezier_forward_impl.1} parent=1 // pred_fallthru
      _
    // Predicated region
    $region18: #{_bezier_forward_impl.1} parent=1 // pred_check
      _
    $region19: #{_bezier_forward_impl.1} parent=1 // pred_check_branch
      %85 = sbr.rel (0) target = $region21
    $region20: #{_bezier_forward_impl.1} parent=1 // pred_region
      _
    $region21: #{_bezier_forward_impl.1} parent=1 // pred_fallthru
      _
    %86 = vsyncpa [#allocation3], 1

</llo_original>
